<compile_context>
chip_gen: v7x
topology: tpu7x:2x2x1
jax: 0.10.0
libtpu: 0.0.40
codegen_flags: <defaults>
</compile_context>

<pallas_src>
import functools

import jax
import jax.numpy as jnp
from jax.experimental import pallas as pl
from jax.experimental.pallas import tpu as pltpu


def odef_mlp_kernel(x_ref, w1_ref, b1_ref, w2_ref, b2_ref, o_ref):
    # Two MXU matmuls + VPU bias/ReLU on VMEM-resident tiles; f32 accumulation throughout.
    x = x_ref[...]
    h = jnp.dot(x, w1_ref[...], preferred_element_type=jnp.float32)
    h = jnp.maximum(h + b1_ref[...], 0.0)
    o = jnp.dot(h, w2_ref[...], preferred_element_type=jnp.float32) + b2_ref[...]
    o_ref[...] = o.astype(o_ref.dtype)


def _round_up(n, m):
    return ((n + m - 1) // m) * m


def prepare_odef_params(w1, b1, w2, b2):
    """One-time parameter prep, hoisted out of the per-step forward.

    Weights are kept untouched (no padding needed: full-extent blocks are legal);
    biases are stored as (1, H) rows so the kernel broadcasts them directly.
    """
    return w1, jnp.reshape(b1, (1, -1)), w2, jnp.reshape(b2, (1, -1))


def _pick_batch_tiling(B, max_single_block_batch, batch_tile):
    """Static (shape-dependent) batch tiling choice."""
    b8 = _round_up(B, 8)
    if b8 <= max_single_block_batch:
        if b8 >= 16:
            # >= 2 blocks so dimension_semantics=("parallel",) can shard the batch axis
            # across v7x's two TensorCores.  Pad to a multiple of 16 so the two blocks
            # divide the padded batch exactly (tile stays a multiple of 8 sublanes).
            b_pad = _round_up(B, 16)
            tile_b = b_pad // 2
        else:
            b_pad = b8
            tile_b = b8
    else:
        # Large-batch path: big tile, cdiv grid, no rounding of B up to a tile multiple.
        tile_b = min(batch_tile, b8)
        b_pad = b8
    grid = pl.cdiv(b_pad, tile_b)
    return b_pad, tile_b, grid


def _vmem_limit_bytes(tile_b, in_dim, hidden, out_dim, itemsize):
    # Double-buffered x/out tiles + (default double-buffered) resident weights/biases
    # + f32 intermediates, with 2x headroom for compiler scratch.  Clamped so the limit
    # never exceeds v7x's 64 MiB physical VMEM.
    tiles = 2 * tile_b * (in_dim + out_dim) * itemsize
    weights = 2 * (in_dim * hidden + hidden + hidden * out_dim + out_dim) * itemsize
    interm = 3 * tile_b * hidden * 4
    est = 2 * (tiles + weights + interm)
    return int(min(max(est, 16 * 1024 * 1024), 56 * 1024 * 1024))


@functools.partial(jax.jit, static_argnames=("max_single_block_batch", "batch_tile"))
def odef_forward(t, x, w1, b1, w2, b2, *, max_single_block_batch=512, batch_tile=512):
    """Pallas equivalent of ODEF.forward(t, x) == net(x).

    t is accepted for API parity but unused (matches the PyTorch module).
    x : [B, in_dim]
    w1: [in_dim, hidden], b1: [hidden] or [1, hidden]
    w2: [hidden, out_dim], b2: [out_dim] or [1, out_dim]
    """
    del t  # unused, exactly as in the PyTorch module
    B, in_dim = x.shape
    hidden = w1.shape[1]
    out_dim = w2.shape[1]
    dtype = x.dtype

    # No-ops if prepare_odef_params() was used; kept for API robustness.
    b1 = jnp.reshape(b1, (1, hidden))
    b2 = jnp.reshape(b2, (1, out_dim))

    b_pad, tile_b, grid = _pick_batch_tiling(B, max_single_block_batch, batch_tile)
    xp = x if b_pad == B else jnp.pad(x, ((0, b_pad - B), (0, 0)))

    out = pl.pallas_call(
        odef_mlp_kernel,
        out_shape=jax.ShapeDtypeStruct((b_pad, out_dim), dtype),
        grid_spec=pltpu.PrefetchScalarGridSpec(
            num_scalar_prefetch=0,
            grid=(grid,),
            in_specs=[
                pl.BlockSpec((tile_b, in_dim), lambda i: (i, 0)),    # x tile
                pl.BlockSpec((in_dim, hidden), lambda i: (0, 0)),    # W1 (resident, full-extent)
                pl.BlockSpec((1, hidden), lambda i: (0, 0)),         # b1
                pl.BlockSpec((hidden, out_dim), lambda i: (0, 0)),   # W2 (resident, full-extent)
                pl.BlockSpec((1, out_dim), lambda i: (0, 0)),        # b2
            ],
            out_specs=pl.BlockSpec((tile_b, out_dim), lambda i: (i, 0)),
        ),
        compiler_params=pltpu.CompilerParams(
            dimension_semantics=("parallel",),
            vmem_limit_bytes=_vmem_limit_bytes(
                tile_b, in_dim, hidden, out_dim, jnp.dtype(dtype).itemsize),
        ),
    )(xp, w1, b1, w2, b2)

    return out if b_pad == B else out[:B]


def init_odef_params(key, in_dim, hidden_dim, out_dim, dtype=jnp.float32):
    """Deterministic init mimicking nn.Linear's default U(-1/sqrt(fan_in), 1/sqrt(fan_in))."""
    k1, k2, k3, k4 = jax.random.split(key, 4)
    bound1 = 1.0 / jnp.sqrt(in_dim)
    bound2 = 1.0 / jnp.sqrt(hidden_dim)
    # Stored already transposed to [in_features, out_features].
    w1 = jax.random.uniform(k1, (in_dim, hidden_dim), dtype, -bound1, bound1)
    b1 = jax.random.uniform(k2, (1, hidden_dim), dtype, -bound1, bound1)
    w2 = jax.random.uniform(k3, (hidden_dim, out_dim), dtype, -bound2, bound2)
    b2 = jax.random.uniform(k4, (1, out_dim), dtype, -bound2, bound2)
    return w1, b1, w2, b2


def odef_reference(t, x, w1, b1, w2, b2):
    del t
    h = jnp.maximum(x @ w1 + b1, 0.0)
    return h @ w2 + b2


if __name__ == "__main__":
    key = jax.random.PRNGKey(0)
    kx, kt, kp = jax.random.split(key, 3)

    batch, in_dim, hidden_dim, out_dim = 64, 16, 32, 16
    x = jax.random.normal(kx, (batch, in_dim), jnp.float32)
    t = jax.random.normal(kt, (), jnp.float32)  # ignored by forward, as in PyTorch

    # One-time parameter preparation (hoisted out of the per-step dynamics evaluation).
    w1, b1, w2, b2 = prepare_odef_params(*init_odef_params(kp, in_dim, hidden_dim, out_dim))

    out = jax.block_until_ready(odef_forward(t, x, w1, b1, w2, b2))
    ref = odef_reference(t, x, w1, b1, w2, b2)
    assert out.shape == (batch, out_dim)
    assert jnp.allclose(out, ref, atol=1e-5, rtol=1e-5), "mismatch vs reference"

    # Also exercise an odd (non-multiple-of-8) batch to confirm the batch-padded path.
    x_odd = x[:37]
    out_odd = jax.block_until_ready(odef_forward(t, x_odd, w1, b1, w2, b2))
    assert out_odd.shape == (37, out_dim)
    assert jnp.allclose(out_odd, odef_reference(t, x_odd, w1, b1, w2, b2),
                        atol=1e-5, rtol=1e-5), "mismatch vs reference (odd batch)"

    print("KERNEL_OK")
</pallas_src>

<mosaic_0001>
module attributes {stable_mosaic.version = 11 : i64} {
  func.func @odef_mlp_kernel(%arg0: i32, %arg1: memref<32x16xf32, #tpu.memory_space<vmem>>, %arg2: memref<16x32xf32, #tpu.memory_space<vmem>>, %arg3: memref<1x32xf32, #tpu.memory_space<vmem>>, %arg4: memref<32x16xf32, #tpu.memory_space<vmem>>, %arg5: memref<1x16xf32, #tpu.memory_space<vmem>>, %arg6: memref<32x16xf32, #tpu.memory_space<vmem>>) attributes {dimension_semantics = [#tpu.dimension_semantics<parallel>], iteration_bounds = array<i64: 2>, scalar_prefetch = 0 : i64, scratch_operands = 0 : i64, tpu.core_type = #tpu.core_type<tc>, window_params = [{transform_indices = @transform_0, window_bounds = array<i64: 32, 16>}, {pipeline_mode = #tpu.pipeline_mode<synchronous>, transform_indices = @transform_1, window_bounds = array<i64: 16, 32>}, {pipeline_mode = #tpu.pipeline_mode<synchronous>, transform_indices = @transform_2, window_bounds = array<i64: 1, 32>}, {pipeline_mode = #tpu.pipeline_mode<synchronous>, transform_indices = @transform_3, window_bounds = array<i64: 32, 16>}, {pipeline_mode = #tpu.pipeline_mode<synchronous>, transform_indices = @transform_4, window_bounds = array<i64: 1, 16>}, {transform_indices = @transform_5, window_bounds = array<i64: 32, 16>}]} {
    %c0 = arith.constant 0 : index
    %c0_0 = arith.constant 0 : index
    %0 = vector.load %arg1[%c0, %c0_0] : memref<32x16xf32, #tpu.memory_space<vmem>>, vector<32x16xf32>
    %c0_1 = arith.constant 0 : index
    %c0_2 = arith.constant 0 : index
    %1 = vector.load %arg2[%c0_1, %c0_2] : memref<16x32xf32, #tpu.memory_space<vmem>>, vector<16x32xf32>
    %cst = arith.constant dense<0.000000e+00> : vector<32x32xf32>
    %2 = tpu.matmul %0, %1, %cst {dimension_numbers = #tpu.dot_dimension_numbers<[1], [0], [0], [1], [0, 0, 1, 1], [], []>} : vector<32x16xf32>, vector<16x32xf32>, vector<32x32xf32> -> vector<32x32xf32>
    %c0_3 = arith.constant 0 : index
    %c0_4 = arith.constant 0 : index
    %3 = vector.load %arg3[%c0_3, %c0_4] : memref<1x32xf32, #tpu.memory_space<vmem>>, vector<1x32xf32>
    %4 = vector.broadcast %3 : vector<1x32xf32> to vector<32x32xf32>
    %5 = arith.addf %2, %4 : vector<32x32xf32>
    %cst_5 = arith.constant 0.000000e+00 : f32
    %6 = vector.broadcast %cst_5 : f32 to vector<32x32xf32>
    %7 = arith.maximumf %5, %6 : vector<32x32xf32>
    %c0_6 = arith.constant 0 : index
    %c0_7 = arith.constant 0 : index
    %8 = vector.load %arg4[%c0_6, %c0_7] : memref<32x16xf32, #tpu.memory_space<vmem>>, vector<32x16xf32>
    %cst_8 = arith.constant dense<0.000000e+00> : vector<32x16xf32>
    %9 = tpu.matmul %7, %8, %cst_8 {dimension_numbers = #tpu.dot_dimension_numbers<[1], [0], [0], [1], [0, 0, 1, 1], [], []>} : vector<32x32xf32>, vector<32x16xf32>, vector<32x16xf32> -> vector<32x16xf32>
    %c0_9 = arith.constant 0 : index
    %c0_10 = arith.constant 0 : index
    %10 = vector.load %arg5[%c0_9, %c0_10] : memref<1x16xf32, #tpu.memory_space<vmem>>, vector<1x16xf32>
    %11 = vector.broadcast %10 : vector<1x16xf32> to vector<32x16xf32>
    %12 = arith.addf %9, %11 : vector<32x16xf32>
    %c0_11 = arith.constant 0 : index
    %c0_12 = arith.constant 0 : index
    %13 = vector.load %arg6[%c0_11, %c0_12] : memref<32x16xf32, #tpu.memory_space<vmem>>, vector<32x16xf32>
    tpu.vector_store %arg6[%c0_11, %c0_12], %12 {strides = array<i32>} : memref<32x16xf32, #tpu.memory_space<vmem>>, vector<32x16xf32>,
    return
  }
  func.func @transform_0(%arg0: i32) -> (i32, i32) {
    %c0_i32 = arith.constant 0 : i32
    %c0_i32_0 = arith.constant 0 : i32
    return %arg0, %c0_i32 : i32, i32
  }
  func.func @transform_1(%arg0: i32) -> (i32, i32) {
    %c0_i32 = arith.constant 0 : i32
    %c0_i32_0 = arith.constant 0 : i32
    %c0_i32_1 = arith.constant 0 : i32
    return %c0_i32, %c0_i32_0 : i32, i32
  }
  func.func @transform_2(%arg0: i32) -> (i32, i32) {
    %c0_i32 = arith.constant 0 : i32
    %c0_i32_0 = arith.constant 0 : i32
    %c0_i32_1 = arith.constant 0 : i32
    return %c0_i32, %c0_i32_0 : i32, i32
  }
  func.func @transform_3(%arg0: i32) -> (i32, i32) {
    %c0_i32 = arith.constant 0 : i32
    %c0_i32_0 = arith.constant 0 : i32
    %c0_i32_1 = arith.constant 0 : i32
    return %c0_i32, %c0_i32_0 : i32, i32
  }
  func.func @transform_4(%arg0: i32) -> (i32, i32) {
    %c0_i32 = arith.constant 0 : i32
    %c0_i32_0 = arith.constant 0 : i32
    %c0_i32_1 = arith.constant 0 : i32
    return %c0_i32, %c0_i32_0 : i32, i32
  }
  func.func @transform_5(%arg0: i32) -> (i32, i32) {
    %c0_i32 = arith.constant 0 : i32
    %c0_i32_0 = arith.constant 0 : i32
    return %arg0, %c0_i32 : i32, i32
  }
}

</mosaic_0001>

<llo_original>
// kernel: odef_forward.1
$region0: #{odef_forward.1}
  #allocation0 [shape = 'u32[]', space=smem, size = 0x4, offset = 0x4, fixed_abs, tag = 'smem constant byte address 0x4 - core index']
  #allocation1 [shape = 'u32[144,128]{1,0:T(1,128)}', space=vmem, size = 0x12000, scoped, tag = 'internal scratch']
  %s0 = inlined_call_operand.vmem [shape: f32[64,16], index: 0, kind: input, shape index: {}]
  %s1 = inlined_call_operand.vmem [shape: f32[16,32], index: 1, kind: input, shape index: {}]
  %s2 = inlined_call_operand.vmem [shape: f32[1,32], index: 2, kind: input, shape index: {}]
  %s3 = inlined_call_operand.vmem [shape: f32[32,16], index: 3, kind: input, shape index: {}]
  %s4 = inlined_call_operand.vmem [shape: f32[1,16], index: 4, kind: input, shape index: {}]
  %s5 = inlined_call_operand.vmem [shape: f32[64,16], index: 5, kind: output, shape index: {}]
  %s6 = sld [smem:[#allocation0]]
  $region53: #{odef_forward.1} parent=0
    _
  %s8 = ssub.s32 1, %s6
  %s9 = scalar_select 0, %s8, %s6
  loop: start=0, step=1, limit=4
  $region2: #{odef_forward.1} parent=0 // loop_pre_header
    _
  $region3: #{odef_forward.1} parent=0 // loop_header
    %s11 = sphi 0, %s15
    %p12 = scmp.ge.s32.totalorder %s11, 4
    %s21 = sphi 0, %s23
    %s24 = sphi 0, %s21
    %s25 = sphi 0, %s24
    %s41 = sphi 0, %s25
    %s45 = sphi 0, %s45
    %s47 = sphi 0, %s45
    %s48 = sphi 0, %s47
    %s62 = sphi 0, %s48
    %s66 = sphi 0, %s66
    %s68 = sphi 0, %s66
    %s69 = sphi 0, %s68
    %s83 = sphi 0, %s69
    %s87 = sphi 0, %s87
    %s89 = sphi 0, %s87
    %s90 = sphi 0, %s89
    %s104 = sphi 0, %s90
    %s108 = sphi 0, %s108
    %s110 = sphi 0, %s108
    %s111 = sphi 0, %s110
    %s125 = sphi 0, %s111
    %s131 = sphi 0, %s133
    %s134 = sphi 0, %s131
    %s135 = sphi 0, %s134
    %s151 = sphi 0, %s135
  $region4: #{odef_forward.1} parent=0 // loop_header_branch
    %14 = sbr.rel (%p12) target = $region8
  $region5: #{odef_forward.1} parent=0 // loop_body
    %s16 = ssub.s32 %s11, 1
    %s17 = ssub.s32 %s11, 2
    %s18 = sadd.s32 %s11, 1
    %s19 = ssub.s32 %s11, %s18
    %p20 = scmp.eq.s32.totalorder %s19, 0
    %s22 = sadd.s32 %s21, 1
    %s23 = scalar_select %p20, %s21, %s22
    %p26 = pneg %p20
    %p27 = scmp.eq.s32.totalorder %s11, 1
    %p28 = por %p26, %p27
    %p29 = scmp.ne.s32.totalorder %s21, %s24
    %p30 = scmp.eq.s32.totalorder %s11, 0
    %p31 = por %p29, %p30
    %p32 = scmp.ne.s32.totalorder %s21, %s24
    %p33 = scmp.eq.s32.totalorder %s16, 1
    %p34 = por %p32, %p33
    %p35 = scmp.ne.s32.totalorder %s24, %s25
    %p36 = scmp.eq.s32.totalorder %s16, 0
    %p37 = por %p35, %p36
    %p38 = scmp.ne.s32.totalorder %s24, %s25
    %p39 = scmp.eq.s32.totalorder %s17, 1
    %p40 = por %p38, %p39
    %p42 = scmp.ne.s32.totalorder %s25, %s41
    %p43 = scmp.eq.s32.totalorder %s17, 0
    %p44 = por %p42, %p43
    %s46 = sadd.s32 %s45, 1
    %p49 = scmp.eq.s32.totalorder %s11, 1
    %p50 = scmp.ne.s32.totalorder %s45, %s47
    %p51 = scmp.eq.s32.totalorder %s11, 0
    %p52 = por %p50, %p51
    %p53 = scmp.ne.s32.totalorder %s45, %s47
    %p54 = scmp.eq.s32.totalorder %s16, 1
    %p55 = por %p53, %p54
    %p56 = scmp.ne.s32.totalorder %s47, %s48
    %p57 = scmp.eq.s32.totalorder %s16, 0
    %p58 = por %p56, %p57
    %p59 = scmp.ne.s32.totalorder %s47, %s48
    %p60 = scmp.eq.s32.totalorder %s17, 1
    %p61 = por %p59, %p60
    %p63 = scmp.ne.s32.totalorder %s48, %s62
    %p64 = scmp.eq.s32.totalorder %s17, 0
    %p65 = por %p63, %p64
    %s67 = sadd.s32 %s66, 1
    %p70 = scmp.eq.s32.totalorder %s11, 1
    %p71 = scmp.ne.s32.totalorder %s66, %s68
    %p72 = scmp.eq.s32.totalorder %s11, 0
    %p73 = por %p71, %p72
    %p74 = scmp.ne.s32.totalorder %s66, %s68
    %p75 = scmp.eq.s32.totalorder %s16, 1
    %p76 = por %p74, %p75
    %p77 = scmp.ne.s32.totalorder %s68, %s69
    %p78 = scmp.eq.s32.totalorder %s16, 0
    %p79 = por %p77, %p78
    %p80 = scmp.ne.s32.totalorder %s68, %s69
    %p81 = scmp.eq.s32.totalorder %s17, 1
    %p82 = por %p80, %p81
    %p84 = scmp.ne.s32.totalorder %s69, %s83
    %p85 = scmp.eq.s32.totalorder %s17, 0
    %p86 = por %p84, %p85
    %s88 = sadd.s32 %s87, 1
    %p91 = scmp.eq.s32.totalorder %s11, 1
    %p92 = scmp.ne.s32.totalorder %s87, %s89
    %p93 = scmp.eq.s32.totalorder %s11, 0
    %p94 = por %p92, %p93
    %p95 = scmp.ne.s32.totalorder %s87, %s89
    %p96 = scmp.eq.s32.totalorder %s16, 1
    %p97 = por %p95, %p96
    %p98 = scmp.ne.s32.totalorder %s89, %s90
    %p99 = scmp.eq.s32.totalorder %s16, 0
    %p100 = por %p98, %p99
    %p101 = scmp.ne.s32.totalorder %s89, %s90
    %p102 = scmp.eq.s32.totalorder %s17, 1
    %p103 = por %p101, %p102
    %p105 = scmp.ne.s32.totalorder %s90, %s104
    %p106 = scmp.eq.s32.totalorder %s17, 0
    %p107 = por %p105, %p106
    %s109 = sadd.s32 %s108, 1
    %p112 = scmp.eq.s32.totalorder %s11, 1
    %p113 = scmp.ne.s32.totalorder %s108, %s110
    %p114 = scmp.eq.s32.totalorder %s11, 0
    %p115 = por %p113, %p114
    %p116 = scmp.ne.s32.totalorder %s108, %s110
    %p117 = scmp.eq.s32.totalorder %s16, 1
    %p118 = por %p116, %p117
    %p119 = scmp.ne.s32.totalorder %s110, %s111
    %p120 = scmp.eq.s32.totalorder %s16, 0
    %p121 = por %p119, %p120
    %p122 = scmp.ne.s32.totalorder %s110, %s111
    %p123 = scmp.eq.s32.totalorder %s17, 1
    %p124 = por %p122, %p123
    %p126 = scmp.ne.s32.totalorder %s111, %s125
    %p127 = scmp.eq.s32.totalorder %s17, 0
    %p128 = por %p126, %p127
    %s129 = ssub.s32 %s11, %s18
    %p130 = scmp.eq.s32.totalorder %s129, 0
    %s132 = sadd.s32 %s131, 1
    %s133 = scalar_select %p130, %s131, %s132
    %p136 = pneg %p130
    %p137 = scmp.eq.s32.totalorder %s11, 1
    %p138 = por %p136, %p137
    %p139 = scmp.ne.s32.totalorder %s131, %s134
    %p140 = scmp.eq.s32.totalorder %s11, 0
    %p141 = por %p139, %p140
    %p142 = scmp.ne.s32.totalorder %s131, %s134
    %p143 = scmp.eq.s32.totalorder %s16, 1
    %p144 = por %p142, %p143
    %p145 = scmp.ne.s32.totalorder %s134, %s135
    %p146 = scmp.eq.s32.totalorder %s16, 0
    %p147 = por %p145, %p146
    %p148 = scmp.ne.s32.totalorder %s134, %s135
    %p149 = scmp.eq.s32.totalorder %s17, 1
    %p150 = por %p148, %p149
    %p152 = scmp.ne.s32.totalorder %s135, %s151
    %p153 = scmp.eq.s32.totalorder %s17, 0
    %p154 = por %p152, %p153
    %p155 = scmp.le.s32.totalorder 1, %s11
    %p156 = scmp.lt.s32.totalorder %s11, 3
    %p157 = pnand %p155, %p156
    %p158 = pneg %p157
    // Predicated region
    $region9: #{odef_forward.1} parent=5 // pred_check
      _
    $region10: #{odef_forward.1} parent=5 // pred_check_branch
      %160 = sbr.rel (%p157) target = $region12
    $region11: #{odef_forward.1} parent=5 // pred_region
      %s161 = ssub.s32 %s11, 1
      // Predicated region
      $region13: #{odef_forward.1} parent=11 // pred_check
        %p162 = pneg %p58
      $region14: #{odef_forward.1} parent=11 // pred_check_branch
        %164 = sbr.rel (%p162) target = $region16
      $region15: #{odef_forward.1} parent=11 // pred_region
        _
      $region16: #{odef_forward.1} parent=11 // pred_fallthru
        _
      // Predicated region
      $region17: #{odef_forward.1} parent=11 // pred_check
        %p165 = pneg %p79
      $region18: #{odef_forward.1} parent=11 // pred_check_branch
        %167 = sbr.rel (%p165) target = $region20
      $region19: #{odef_forward.1} parent=11 // pred_region
        _
      $region20: #{odef_forward.1} parent=11 // pred_fallthru
        _
      // Predicated region
      $region21: #{odef_forward.1} parent=11 // pred_check
        %p168 = pneg %p100
      $region22: #{odef_forward.1} parent=11 // pred_check_branch
        %170 = sbr.rel (%p168) target = $region24
      $region23: #{odef_forward.1} parent=11 // pred_region
        _
      $region24: #{odef_forward.1} parent=11 // pred_fallthru
        _
      // Predicated region
      $region25: #{odef_forward.1} parent=11 // pred_check
        %p171 = pneg %p121
      $region26: #{odef_forward.1} parent=11 // pred_check_branch
        %173 = sbr.rel (%p171) target = $region28
      $region27: #{odef_forward.1} parent=11 // pred_region
        _
      $region28: #{odef_forward.1} parent=11 // pred_fallthru
        _
    $region12: #{odef_forward.1} parent=5 // pred_fallthru
      _
    %p174 = scmp.lt.s32.totalorder %s11, 2
    // Predicated region
    $region29: #{odef_forward.1} parent=5 // pred_check
      %p175 = pneg %p174
    $region30: #{odef_forward.1} parent=5 // pred_check_branch
      %177 = sbr.rel (%p175) target = $region32
    $region31: #{odef_forward.1} parent=5 // pred_region
      // Predicated region
      $region33: #{odef_forward.1} parent=31 // pred_check
        %p178 = pneg %p31
      $region34: #{odef_forward.1} parent=31 // pred_check_branch
        %180 = sbr.rel (%p178) target = $region36
      $region35: #{odef_forward.1} parent=31 // pred_region
        %s181 = smul.u32 4, %s11
        %p182 = scmp.lt.s32.totalorder %s181, 7
        %s183 = scalar_select %p182, %s181, 7
        %s184 = smul.addr %s183, 8
        %s185 = scalar_lea.vmem %s0, %s184
        %s186 = smul.u32 4, %s11
      $region36: #{odef_forward.1} parent=31 // pred_fallthru
        _
    $region32: #{odef_forward.1} parent=5 // pred_fallthru
      _
    %p187 = scmp.le.s32.totalorder 1, %s11
    %p188 = scmp.lt.s32.totalorder %s11, 3
    %p189 = pnand %p187, %p188
    %p190 = pneg %p189
    // Predicated region
    $region37: #{odef_forward.1} parent=5 // pred_check
      _
    $region38: #{odef_forward.1} parent=5 // pred_check_branch
      %192 = sbr.rel (%p189) target = $region40
    $region39: #{odef_forward.1} parent=5 // pred_region
      %s193 = ssub.s32 %s11, 1
      %s194 = smul.u32 4, %s16
      %p195 = scmp.lt.s32.totalorder %s194, 7
      %s196 = scalar_select %p195, %s194, 7
      %s197 = smul.addr %s196, 8
      %s198 = scalar_lea.vmem %s0, %s197
      %p199 = pneg %p37
      %p200 = pneg %p34
      %p201 = pneg %p58
      %p202 = pneg %p55
      %p203 = pneg %p79
      %p204 = pneg %p76
      %p205 = pneg %p100
      %p206 = pneg %p97
      %p207 = pneg %p121
      %p208 = pneg %p118
      %p209 = pneg %p147
      %p210 = pneg %p144
      %s211 = smul.u32 4, %s16
      %p212 = scmp.lt.s32.totalorder %s211, 7
      %s213 = scalar_select %p212, %s211, 7
      %s214 = smul.addr %s213, 8
      %s215 = scalar_lea.vmem %s5, %s214
      %s216 = smul.u32 4, %s16
      %p217 = scmp.lt.s32.totalorder %s216, 7
      %s218 = scalar_select %p217, %s216, 7
      %s219 = smul.addr %s218, 8
      %s220 = scalar_lea.vmem %s0, %s219
      %s221 = smul.u32 4, %s16
      %s222 = smul.u32 4, %s16
      %p223 = scmp.lt.s32.totalorder %s222, 7
      %s224 = scalar_select %p223, %s222, 7
      %s225 = smul.addr %s224, 8
      %s226 = scalar_lea.vmem %s5, %s225
      %s227 = smul.u32 4, %s16
      %v228 = vld [vmem:[%s220] sm:$0xff]
      %v229 = vld [vmem:[%s220 + $0x8] sm:$0xff]
      %v230 = vld [vmem:[%s220 + $0x10] sm:$0xff]
      %v231 = vld [vmem:[%s220 + $0x18] sm:$0xff]
      %v232 = vld [vmem:[%s1] sm:$0xff]
      %v233 = vld [vmem:[%s1 + $0x8] sm:$0xff]
      %v234 = vld [vmem:[%s2] sm:$0x1]
      %v236 = vlaneseq
      %v237 = vshrl.u32 %v236, 7
      %v238 = vsub.s32 0, %v237
      %v239 = vrot.slane %v234, %v238
      %vm241 = vcmask 130048
      %v243 = vsel %vm241, %v228, 0
      %v246 = vsel %vm241, %v229, 0
      %v249 = vsel %vm241, %v230, 0
      %v252 = vsel %vm241, %v231, 0
      %254 = vmatprep.subr.mxu0 0.0
      %255 = vmatpush1.msra.mxu0 %v232
      %256 = vmatprep.subr.mxu0 0.0
      %257 = vmatpush1.msra.mxu0 %v233
      %258 = vmatprep.subr.mxu0 0.0
      %259 = vmatpush1.msra.mxu0 0.0
      %260 = vmatprep.subr.mxu0 0.0
      %261 = vmatpush1.msra.mxu0 0.0
      %262 = vmatprep.subr.mxu0 0.0
      %263 = vmatpush1.msra.mxu0 0.0
      %264 = vmatprep.subr.mxu0 0.0
      %265 = vmatpush1.msra.mxu0 0.0
      %266 = vmatprep.subr.mxu0 0.0
      %267 = vmatpush1.msra.mxu0 0.0
      %268 = vmatprep.subr.mxu0 0.0
      %269 = vmatpush1.msra.mxu0 0.0
      %270 = vmatprep.subr.mxu0 0.0
      %271 = vmatpush1.msra.mxu0 0.0
      %272 = vmatprep.subr.mxu0 0.0
      %273 = vmatpush1.msra.mxu0 0.0
      %274 = vmatprep.subr.mxu0 0.0
      %275 = vmatpush1.msra.mxu0 0.0
      %276 = vmatprep.subr.mxu0 0.0
      %277 = vmatpush1.msra.mxu0 0.0
      %278 = vmatprep.subr.mxu0 0.0
      %279 = vmatpush1.msra.mxu0 0.0
      %280 = vmatprep.subr.mxu0 0.0
      %281 = vmatpush1.msra.mxu0 0.0
      %282 = vmatprep.subr.mxu0 0.0
      %283 = vmatpush1.msra.mxu0 0.0
      %284 = vmatprep.subr.mxu0 0.0
      %285 = vmatpush1.msra.mxu0 0.0
      %286 = vmatprep.subr.mxu0 0.0
      %287 = vmatpush1.msra.mxu0 0.0
      %288 = vmatprep.subr.mxu0 0.0
      %289 = vmatpush1.msra.mxu0 0.0
      %290 = vmatprep.subr.mxu0 0.0
      %291 = vmatpush1.msra.mxu0 0.0
      %292 = vmatprep.subr.mxu0 0.0
      %293 = vmatpush1.msra.mxu0 0.0
      %294 = vmatprep.subr.mxu0 0.0
      %295 = vmatpush1.msra.mxu0 0.0
      %296 = vmatprep.subr.mxu0 0.0
      %297 = vmatpush1.msra.mxu0 0.0
      %298 = vmatprep.subr.mxu0 0.0
      %299 = vmatpush1.msra.mxu0 0.0
      %300 = vmatprep.subr.mxu0 0.0
      %301 = vmatpush1.msra.mxu0 0.0
      %302 = vmatprep.subr.mxu0 0.0
      %303 = vmatpush1.msra.mxu0 0.0
      %304 = vmatprep.subr.mxu0 0.0
      %305 = vmatpush1.msra.mxu0 0.0
      %306 = vmatprep.subr.mxu0 0.0
      %307 = vmatpush1.msra.mxu0 0.0
      %308 = vmatprep.subr.mxu0 0.0
      %309 = vmatpush1.msra.mxu0 0.0
      %310 = vmatprep.subr.mxu0 0.0
      %311 = vmatpush1.msra.mxu0 0.0
      %312 = vmatprep.subr.mxu0 0.0
      %313 = vmatpush1.msra.mxu0 0.0
      %314 = vmatprep.subr.mxu0 0.0
      %315 = vmatpush1.msra.mxu0 0.0
      %316 = vmatprep.subr.mxu0 0.0
      %317 = vmatpush1.msra.mxu0 0.0
      %318 = vmatprep.mubr.f32.mxu0 0.0
      %319 = vmatmul.mubr.f32.gmra.mrb[0].mxu0 %v243
      %v320 = vpop.f32.mrb[0].mxu0
      %v321 = vadd.f32 %v239, %v320
      %v322 = vpop.f32.mrb[0].mxu0
      %323 = vmatprep.mubr.f32.mxu0 0.0
      %324 = vmatmul.mubr.f32.gmra.mrb[0].mxu0 %v246
      %v325 = vpop.f32.mrb[0].mxu0
      %v326 = vadd.f32 %v239, %v325
      %v327 = vpop.f32.mrb[0].mxu0
      %328 = vmatprep.mubr.f32.mxu0 0.0
      %329 = vmatmul.mubr.f32.gmra.mrb[0].mxu0 %v249
      %v330 = vpop.f32.mrb[0].mxu0
      %v331 = vadd.f32 %v239, %v330
      %v332 = vpop.f32.mrb[0].mxu0
      %333 = vmatprep.mubr.f32.mxu0 0.0
      %334 = vmatmul.mubr.f32.gmra.mrb[0].mxu0 %v252
      %v335 = vpop.f32.mrb[0].mxu0
      %v336 = vadd.f32 %v239, %v335
      %v337 = vpop.f32.mrb[0].mxu0
      %338 = vdwg.mxu0
      %v339 = vmax.f32 %v321, 0.0
      %v340 = vmax.f32 %v326, 0.0
      %v341 = vmax.f32 %v331, 0.0
      %v342 = vmax.f32 %v336, 0.0
      %v343 = vld [vmem:[%s3] sm:$0xff]
      %v344 = vld [vmem:[%s3 + $0x8] sm:$0xff]
      %v345 = vld [vmem:[%s3 + $0x10] sm:$0xff]
      %v346 = vld [vmem:[%s3 + $0x18] sm:$0xff]
      %v347 = vld [vmem:[%s4] sm:$0x1]
      %v349 = vlaneseq
      %v350 = vshrl.u32 %v349, 7
      %v351 = vsub.s32 0, %v350
      %v352 = vrot.slane %v347, %v351
      %vm354 = vcmask 261120
      %v356 = vsel %vm354, %v339, 0
      %v359 = vsel %vm354, %v340, 0
      %v362 = vsel %vm354, %v341, 0
      %v365 = vsel %vm354, %v342, 0
      %367 = vmatprep.subr.mxu0 0.0
      %368 = vmatpush1.msra.mxu0 %v343
      %369 = vmatprep.subr.mxu0 0.0
      %370 = vmatpush1.msra.mxu0 %v344
      %371 = vmatprep.subr.mxu0 0.0
      %372 = vmatpush1.msra.mxu0 %v345
      %373 = vmatprep.subr.mxu0 0.0
      %374 = vmatpush1.msra.mxu0 %v346
      %375 = vmatprep.subr.mxu0 0.0
      %376 = vmatpush1.msra.mxu0 0.0
      %377 = vmatprep.subr.mxu0 0.0
      %378 = vmatpush1.msra.mxu0 0.0
      %379 = vmatprep.subr.mxu0 0.0
      %380 = vmatpush1.msra.mxu0 0.0
      %381 = vmatprep.subr.mxu0 0.0
      %382 = vmatpush1.msra.mxu0 0.0
      %383 = vmatprep.subr.mxu0 0.0
      %384 = vmatpush1.msra.mxu0 0.0
      %385 = vmatprep.subr.mxu0 0.0
      %386 = vmatpush1.msra.mxu0 0.0
      %387 = vmatprep.subr.mxu0 0.0
      %388 = vmatpush1.msra.mxu0 0.0
      %389 = vmatprep.subr.mxu0 0.0
      %390 = vmatpush1.msra.mxu0 0.0
      %391 = vmatprep.subr.mxu0 0.0
      %392 = vmatpush1.msra.mxu0 0.0
      %393 = vmatprep.subr.mxu0 0.0
      %394 = vmatpush1.msra.mxu0 0.0
      %395 = vmatprep.subr.mxu0 0.0
      %396 = vmatpush1.msra.mxu0 0.0
      %397 = vmatprep.subr.mxu0 0.0
      %398 = vmatpush1.msra.mxu0 0.0
      %399 = vmatprep.subr.mxu0 0.0
      %400 = vmatpush1.msra.mxu0 0.0
      %401 = vmatprep.subr.mxu0 0.0
      %402 = vmatpush1.msra.mxu0 0.0
      %403 = vmatprep.subr.mxu0 0.0
      %404 = vmatpush1.msra.mxu0 0.0
      %405 = vmatprep.subr.mxu0 0.0
      %406 = vmatpush1.msra.mxu0 0.0
      %407 = vmatprep.subr.mxu0 0.0
      %408 = vmatpush1.msra.mxu0 0.0
      %409 = vmatprep.subr.mxu0 0.0
      %410 = vmatpush1.msra.mxu0 0.0
      %411 = vmatprep.subr.mxu0 0.0
      %412 = vmatpush1.msra.mxu0 0.0
      %413 = vmatprep.subr.mxu0 0.0
      %414 = vmatpush1.msra.mxu0 0.0
      %415 = vmatprep.subr.mxu0 0.0
      %416 = vmatpush1.msra.mxu0 0.0
      %417 = vmatprep.subr.mxu0 0.0
      %418 = vmatpush1.msra.mxu0 0.0
      %419 = vmatprep.subr.mxu0 0.0
      %420 = vmatpush1.msra.mxu0 0.0
      %421 = vmatprep.subr.mxu0 0.0
      %422 = vmatpush1.msra.mxu0 0.0
      %423 = vmatprep.subr.mxu0 0.0
      %424 = vmatpush1.msra.mxu0 0.0
      %425 = vmatprep.subr.mxu0 0.0
      %426 = vmatpush1.msra.mxu0 0.0
      %427 = vmatprep.subr.mxu0 0.0
      %428 = vmatpush1.msra.mxu0 0.0
      %429 = vmatprep.subr.mxu0 0.0
      %430 = vmatpush1.msra.mxu0 0.0
      %431 = vmatprep.mubr.f32.mxu0 0.0
      %432 = vmatmul.mubr.f32.gmra.mrb[0].mxu0 %v356
      %v433 = vpop.f32.mrb[0].mxu0
      %v434 = vadd.f32 %v352, %v433
      %v435 = vpop.f32.mrb[0].mxu0
      %436 = vmatprep.mubr.f32.mxu0 0.0
      %437 = vmatmul.mubr.f32.gmra.mrb[0].mxu0 %v359
      %v438 = vpop.f32.mrb[0].mxu0
      %v439 = vadd.f32 %v352, %v438
      %v440 = vpop.f32.mrb[0].mxu0
      %441 = vmatprep.mubr.f32.mxu0 0.0
      %442 = vmatmul.mubr.f32.gmra.mrb[0].mxu0 %v362
      %v443 = vpop.f32.mrb[0].mxu0
      %v444 = vadd.f32 %v352, %v443
      %v445 = vpop.f32.mrb[0].mxu0
      %446 = vmatprep.mubr.f32.mxu0 0.0
      %447 = vmatmul.mubr.f32.gmra.mrb[0].mxu0 %v365
      %v448 = vpop.f32.mrb[0].mxu0
      %v449 = vadd.f32 %v352, %v448
      %v450 = vpop.f32.mrb[0].mxu0
      %451 = vdwg.mxu0
      %452 = vst.msk [vmem:[%s226] sm:$0xff] %vm241, %v434
      %453 = vst.msk [vmem:[%s226 + $0x8] sm:$0xff] %vm241, %v439
      %454 = vst.msk [vmem:[%s226 + $0x10] sm:$0xff] %vm241, %v444
      %455 = vst.msk [vmem:[%s226 + $0x18] sm:$0xff] %vm241, %v449
      %s456 = smul.u32 4, %s16
      %p457 = scmp.lt.s32.totalorder %s456, 7
      %s458 = scalar_select %p457, %s456, 7
      %s459 = smul.addr %s458, 8
      %s460 = scalar_lea.vmem %s5, %s459
      // Predicated region
      $region41: #{odef_forward.1} parent=39 // pred_check
        %p461 = pneg %p144
      $region42: #{odef_forward.1} parent=39 // pred_check_branch
        %463 = sbr.rel (%p461) target = $region44
      $region43: #{odef_forward.1} parent=39 // pred_region
        %s464 = smul.u32 4, %s16
      $region44: #{odef_forward.1} parent=39 // pred_fallthru
        _
    $region40: #{odef_forward.1} parent=5 // pred_fallthru
      _
    %p465 = scmp.le.s32.totalorder 2, %s11
    // Predicated region
    $region45: #{odef_forward.1} parent=5 // pred_check
      %p466 = pneg %p465
    $region46: #{odef_forward.1} parent=5 // pred_check_branch
      %468 = sbr.rel (%p466) target = $region48
    $region47: #{odef_forward.1} parent=5 // pred_region
      %s469 = ssub.s32 %s11, 2
      // Predicated region
      $region49: #{odef_forward.1} parent=47 // pred_check
        %p470 = pneg %p150
      $region50: #{odef_forward.1} parent=47 // pred_check_branch
        %472 = sbr.rel (%p470) target = $region52
      $region51: #{odef_forward.1} parent=47 // pred_region
        %s473 = smul.u32 4, %s17
        %p474 = scmp.lt.s32.totalorder %s473, 7
        %s475 = scalar_select %p474, %s473, 7
        %s476 = smul.addr %s475, 8
        %s477 = scalar_lea.vmem %s5, %s476
      $region52: #{odef_forward.1} parent=47 // pred_fallthru
        _
    $region48: #{odef_forward.1} parent=5 // pred_fallthru
      _
  $region6: #{odef_forward.1} parent=0 // loop_footer
    %s15 = sadd.s32 1, %s11
  $region7: #{odef_forward.1} parent=0 // loop_footer_branch
    %10 = sbr.rel target = $region3
  $region8: #{odef_forward.1} parent=0 // loop_exit
    _

</llo_original>
